<compile_context>
chip_gen: v7x
topology: tpu7x:2x2x1
jax: 0.10.0
libtpu: 0.0.40
codegen_flags: <defaults>
</compile_context>

<pallas_src>
import functools
import math

import jax
import jax.numpy as jnp
from jax.experimental import pallas as pl
from jax.experimental.pallas import tpu as pltpu

_PI = math.pi
_TWO_PI = 2.0 * math.pi


def _make_kernel(L, tb, last_lane, seq_tiles_per_block, total_seq_tiles,
                 split_seq, block_reduce):
    """Builds the kernel for (tb, L)-shaped interleaved input blocks."""

    def _reduce_to_tile(x):
        # (tb, L) -> (8, 128) partial-sum tile using only (8,128)-aligned static
        # slices + full-vreg VPU adds (no per-step cross-lane XLU reduction).
        part = x[0:8, :]
        for r in range(1, tb // 8):
            part = part + x[r * 8:(r + 1) * 8, :]
        acc = part[:, 0:128]
        for c in range(1, L // 128):
            acc = acc + part[:, c * 128:(c + 1) * 128]
        return acc

    def _scalar_to_tile(s):
        # Place scalar s at element [0, 0] of an (8, 128) tile (zeros elsewhere)
        # so the wrapper can always finalize with a single jnp.sum.
        row = jax.lax.broadcasted_iota(jnp.int32, (8, 128), 0)
        col = jax.lax.broadcasted_iota(jnp.int32, (8, 128), 1)
        return jnp.where((row == 0) & (col == 0), s, 0.0)

    def kernel(pred_ref, tgt_ref, tot_ref, sgl_ref):
        i = pl.program_id(0)
        j = pl.program_id(1)
        gj = i * seq_tiles_per_block + j if split_seq else j

        @pl.when(j == 0)
        def _init():
            tot_ref[...] = jnp.zeros_like(tot_ref)
            sgl_ref[...] = jnp.zeros_like(sgl_ref)

        # (tb, L) blocks of the native interleaved layout: x0 y0 x1 y1 ...
        vp = pred_ref[...].astype(jnp.float32)
        vt = tgt_ref[...].astype(jnp.float32)

        # Lane rotations (XLU; np.roll semantics: roll(v, s)[i] == v[(i - s) % L]).
        prv_p = pltpu.roll(vp, shift=1, axis=1)        # prv_p[i] = vp[i - 1]
        nxt_t = pltpu.roll(vt, shift=L - 1, axis=1)    # nxt_t[i] = vt[i + 1]

        lane = jax.lax.broadcasted_iota(jnp.int32, vp.shape, 1)
        odd = (lane % 2) == 1

        # Pack pred headings on odd lanes and target headings on even lanes so a
        # single atan2 covers both tensors:
        #   odd  lane 2k+1: (y, x) = (vp[2k+1], vp[2k]) -> pred heading  pa_k
        #   even lane 2k  : (y, x) = (vt[2k+1], vt[2k]) -> target heading ta_k
        y_pk = jnp.where(odd, vp, nxt_t)
        x_pk = jnp.where(odd, prv_p, vt)
        ang = jnp.arctan2(y_pk, x_pk)

        # Align pa_k (odd lane 2k+1) onto even lane 2k and take the wrapped,
        # folded absolute difference |wrap(ta - pa)| in [0, pi].  This equals
        # the reference chain atan2(sin d, cos d) -> mod 2pi -> fold.
        ang_nxt = pltpu.roll(ang, shift=L - 1, axis=1)  # ang_nxt[2k] = pa_k
        d = jnp.abs(ang - ang_nxt)
        ad = jnp.where(d > _PI, _TWO_PI - d, d)
        ad = jnp.where(odd, 0.0, ad)                    # valid results on even lanes

        if block_reduce:
            tot_ref[...] += _reduce_to_tile(ad)
        else:
            tot_ref[...] += _scalar_to_tile(jnp.sum(ad))

        @pl.when(gj == total_seq_tiles - 1)
        def _single():
            # Heading error of the final trajectory point of each batch row
            # (even lane `last_lane` of the last sequence tile).
            sd = jnp.where(lane == last_lane, ad, 0.0)
            if block_reduce:
                sgl_ref[...] += _reduce_to_tile(sd)
            else:
                sgl_ref[...] += _scalar_to_tile(jnp.sum(sd))

    return kernel


def _is_v7x():
    try:
        kind = jax.devices()[0].device_kind.lower()
    except Exception:
        return False
    return ("v7" in kind) or ("7x" in kind)


def _choose_tiles(B, S_pad, is_v7x, blk_cap=None):
    # Per-input block budget in f32 elements of a (tb, 2*ts) block:
    #   v7x:    <= 512K elems (2 MiB)  -- 64 MiB physical / 32 MiB scoped VMEM
    #   v5e/6e: <= 2M   elems (8 MiB)  -- 128 MiB physical VMEM (scoped raised)
    if blk_cap is None:
        blk_cap = (512 * 1024) if is_v7x else (2 * 1024 * 1024)
    # Batch tile: only pre-split for v7x's two TensorCores; single-TC chips keep
    # the whole batch per block (fewer grid steps, larger DMAs).
    if is_v7x and B % 16 == 0:
        tb = B // 2
    else:
        tb = B
    ts = S_pad
    while tb * 2 * ts > blk_cap and ts % 256 == 0:
        ts //= 2
    while tb * 2 * ts > blk_cap and tb % 16 == 0:
        tb //= 2
    return tb, ts


def directional_gps_loss(pred, target, alpha=0.3, beta=0.7, block_elems_cap=None):
    """pred, target: (B, S, 2) arrays holding (x, y). Returns scalar f32 loss."""
    assert pred.shape == target.shape and pred.shape[-1] == 2
    B, S, _ = pred.shape
    is_v7x = _is_v7x()

    # Free reshape of the native contiguous layout: (B, S, 2) -> (B, 2*S),
    # lanes interleaved x0 y0 x1 y1 ...  (no transpose / relayout in HBM).
    S_pad = max(128, ((S + 127) // 128) * 128)
    p2 = jnp.reshape(pred, (B, 2 * S))
    t2 = jnp.reshape(target, (B, 2 * S))
    if S_pad != S:
        padw = ((0, 0), (0, 2 * (S_pad - S)))
        p2 = jnp.pad(p2, padw)   # zero pairs -> atan2(0,0)=0 -> diff 0
        t2 = jnp.pad(t2, padw)

    tb, ts = _choose_tiles(B, S_pad, is_v7x, block_elems_cap)
    L = 2 * ts
    nb = B // tb
    ns = (2 * S_pad) // L

    # v7x with a single parallel block: split the sequence axis into 2 parallel
    # halves (one per TensorCore), each with its own accumulator rows.
    split_seq = bool(is_v7x and nb == 1 and ns >= 2 and ns % 2 == 0)
    if split_seq:
        half = ns // 2
        grid = (2, half)
        seq_tiles_per_block = half
        n_out = 2
        in_spec = pl.BlockSpec((tb, L), lambda i, j: (0, i * half + j))
    else:
        grid = (nb, ns)
        seq_tiles_per_block = ns
        n_out = nb
        in_spec = pl.BlockSpec((tb, L), lambda i, j: (i, j))

    out_spec = pl.BlockSpec((8, 128), lambda i, j: (i, 0))
    block_reduce = (tb % 8 == 0)
    # Even lane (within the last seq tile) holding x of the last valid element.
    last_lane = (2 * S - 2) % L

    kernel = _make_kernel(L, tb, last_lane, seq_tiles_per_block, ns,
                          split_seq, block_reduce)

    vmem_limit = (32 << 20) if is_v7x else (64 << 20)
    tot, sgl = pl.pallas_call(
        kernel,
        out_shape=(jax.ShapeDtypeStruct((n_out * 8, 128), jnp.float32),
                   jax.ShapeDtypeStruct((n_out * 8, 128), jnp.float32)),
        grid=grid,
        in_specs=[in_spec, in_spec],
        out_specs=[out_spec, out_spec],
        compiler_params=pltpu.CompilerParams(
            dimension_semantics=("parallel", "arbitrary"),
            vmem_limit_bytes=vmem_limit),
    )(p2, t2)

    total_sum = jnp.sum(tot)
    single_sum = jnp.sum(sgl)
    return alpha * total_sum / (B * S) + beta * single_sum / B


def _reference_loss(pred, target, alpha=0.3, beta=0.7):
    # Faithful transcription of the PyTorch forward (chain form, not fused).
    pred_angles = jnp.arctan2(pred[..., 1], pred[..., 0])
    target_angles = jnp.arctan2(target[..., 1], target[..., 0])
    d = target_angles - pred_angles
    ad = jnp.arctan2(jnp.sin(d), jnp.cos(d))
    ad = jnp.mod(ad, _TWO_PI)
    ad = jnp.where(ad > jnp.pi, _TWO_PI - ad, ad)
    angle_mean = jnp.mean(ad)

    pa = jnp.arctan2(pred[:, -1, 1], pred[:, -1, 0])
    ta = jnp.arctan2(target[:, -1, 1], target[:, -1, 0])
    d1 = ta - pa
    sd = jnp.arctan2(jnp.sin(d1), jnp.cos(d1))
    sd = jnp.mod(sd, _TWO_PI)
    sd = jnp.where(sd > jnp.pi, _TWO_PI - sd, sd)
    single_mean = jnp.mean(sd)
    return alpha * angle_mean + beta * single_mean


if __name__ == "__main__":
    key = jax.random.PRNGKey(0)
    k1, k2, k3, k4, k5, k6, k7, k8 = jax.random.split(key, 8)

    loss_fn = jax.jit(functools.partial(directional_gps_loss, alpha=0.3, beta=0.7))

    # Small shape consistent with the module: (batch=2, seq=8, 2).
    B, S = 2, 8
    pred = jax.random.normal(k1, (B, S, 2), dtype=jnp.float32)
    target = jax.random.normal(k2, (B, S, 2), dtype=jnp.float32)
    out = jax.block_until_ready(loss_fn(pred, target))
    ref = jax.block_until_ready(_reference_loss(pred, target, 0.3, 0.7))
    assert jnp.allclose(out, ref, atol=1e-4, rtol=1e-4), (out, ref)

    # Larger shape: lane-dense blocks, shape-preserving (block-mode) accumulation.
    B2, S2 = 16, 2048
    pred2 = jax.random.normal(k3, (B2, S2, 2), dtype=jnp.float32)
    target2 = jax.random.normal(k4, (B2, S2, 2), dtype=jnp.float32)
    out2 = jax.block_until_ready(loss_fn(pred2, target2))
    ref2 = jax.block_until_ready(_reference_loss(pred2, target2, 0.3, 0.7))
    assert jnp.allclose(out2, ref2, atol=1e-4, rtol=1e-4), (out2, ref2)

    # Odd sequence length (exercises the zero-pad + tail-masking path) with a
    # forced small block budget so the seq axis becomes a multi-tile reduction.
    B3, S3 = 16, 1000
    pred3 = jax.random.normal(k5, (B3, S3, 2), dtype=jnp.float32)
    target3 = jax.random.normal(k6, (B3, S3, 2), dtype=jnp.float32)
    small_fn = jax.jit(functools.partial(directional_gps_loss, alpha=0.3, beta=0.7,
                                         block_elems_cap=16 * 1024))
    out3 = jax.block_until_ready(small_fn(pred3, target3))
    ref3 = jax.block_until_ready(_reference_loss(pred3, target3, 0.3, 0.7))
    assert jnp.allclose(out3, ref3, atol=1e-4, rtol=1e-4), (out3, ref3)

    # Small batch, many seq tiles: scalar-mode accumulation across grid steps
    # (and the parallel seq-split path if this happens to run on v7x).
    B4, S4 = 4, 2048
    pred4 = jax.random.normal(k7, (B4, S4, 2), dtype=jnp.float32)
    target4 = jax.random.normal(k8, (B4, S4, 2), dtype=jnp.float32)
    tiny_fn = jax.jit(functools.partial(directional_gps_loss, alpha=0.3, beta=0.7,
                                        block_elems_cap=2 * 1024))
    out4 = jax.block_until_ready(tiny_fn(pred4, target4))
    ref4 = jax.block_until_ready(_reference_loss(pred4, target4, 0.3, 0.7))
    assert jnp.allclose(out4, ref4, atol=1e-4, rtol=1e-4), (out4, ref4)

    print("KERNEL_OK")
</pallas_src>

<mosaic_0001>
module attributes {stable_mosaic.version = 11 : i64} {
  func.func @kernel(%arg0: i32, %arg1: i32, %arg2: memref<2x256xf32, #tpu.memory_space<vmem>>, %arg3: memref<2x256xf32, #tpu.memory_space<vmem>>, %arg4: memref<8x128xf32, #tpu.memory_space<vmem>>, %arg5: memref<8x128xf32, #tpu.memory_space<vmem>>) attributes {dimension_semantics = [#tpu.dimension_semantics<parallel>, #tpu.dimension_semantics<arbitrary>], iteration_bounds = array<i64: 1, 1>, scalar_prefetch = 0 : i64, scratch_operands = 0 : i64, tpu.core_type = #tpu.core_type<tc>, window_params = [{transform_indices = @transform_0, window_bounds = array<i64: 2, 256>}, {transform_indices = @transform_1, window_bounds = array<i64: 2, 256>}, {transform_indices = @transform_2, window_bounds = array<i64: 8, 128>}, {transform_indices = @transform_3, window_bounds = array<i64: 8, 128>}]} {
    %c0_i32 = arith.constant 0 : i32
    %0 = arith.cmpi eq, %arg1, %c0_i32 : i32
    %1 = arith.extui %0 : i1 to i32
    %c0_i32_0 = arith.constant 0 : i32
    %2 = arith.cmpi ne, %1, %c0_i32_0 : i32
    scf.if %2 {
      %cst_23 = arith.constant 0.000000e+00 : f32
      %59 = vector.broadcast %cst_23 : f32 to vector<8x128xf32>
      %c0_24 = arith.constant 0 : index
      %c0_25 = arith.constant 0 : index
      %60 = vector.load %arg4[%c0_24, %c0_25] : memref<8x128xf32, #tpu.memory_space<vmem>>, vector<8x128xf32>
      tpu.vector_store %arg4[%c0_24, %c0_25], %59 {strides = array<i32>} : memref<8x128xf32, #tpu.memory_space<vmem>>, vector<8x128xf32>,
      %cst_26 = arith.constant 0.000000e+00 : f32
      %61 = vector.broadcast %cst_26 : f32 to vector<8x128xf32>
      %c0_27 = arith.constant 0 : index
      %c0_28 = arith.constant 0 : index
      %62 = vector.load %arg5[%c0_27, %c0_28] : memref<8x128xf32, #tpu.memory_space<vmem>>, vector<8x128xf32>
      tpu.vector_store %arg5[%c0_27, %c0_28], %61 {strides = array<i32>} : memref<8x128xf32, #tpu.memory_space<vmem>>, vector<8x128xf32>,
    } else {
    }
    %c0 = arith.constant 0 : index
    %c0_1 = arith.constant 0 : index
    %3 = vector.load %arg2[%c0, %c0_1] : memref<2x256xf32, #tpu.memory_space<vmem>>, vector<2x256xf32>
    %c0_2 = arith.constant 0 : index
    %c0_3 = arith.constant 0 : index
    %4 = vector.load %arg3[%c0_2, %c0_3] : memref<2x256xf32, #tpu.memory_space<vmem>>, vector<2x256xf32>
    %c1_i32 = arith.constant 1 : i32
    %5 = tpu.dynamic_rotate %3 by %c1_i32 dim 1 : vector<2x256xf32>, i32 -> vector<2x256xf32>
    %c255_i32 = arith.constant 255 : i32
    %6 = tpu.dynamic_rotate %4 by %c255_i32 dim 1 : vector<2x256xf32>, i32 -> vector<2x256xf32>
    %7 = tpu.iota {dimensions = array<i32: 1>} : vector<2x256xi32>
    %c2_i32 = arith.constant 2 : i32
    %c0_i32_4 = arith.constant 0 : i32
    %8 = arith.cmpi eq, %c2_i32, %c0_i32_4 : i32
    %c1_i32_5 = arith.constant 1 : i32
    %9 = arith.select %8, %c1_i32_5, %c2_i32 : i32
    %10 = vector.broadcast %9 : i32 to vector<2x256xi32>
    %11 = arith.remsi %7, %10 : vector<2x256xi32>
    %c0_i32_6 = arith.constant 0 : i32
    %12 = vector.broadcast %c0_i32_6 : i32 to vector<2x256xi32>
    %13 = arith.cmpi ne, %11, %12 : vector<2x256xi32>
    %c0_i32_7 = arith.constant 0 : i32
    %14 = vector.broadcast %c0_i32_7 : i32 to vector<2x256xi32>
    %15 = arith.cmpi slt, %11, %14 : vector<2x256xi32>
    %c0_i32_8 = arith.constant 0 : i32
    %16 = arith.cmpi slt, %9, %c0_i32_8 : i32
    %17 = vector.broadcast %16 : i1 to vector<2x256xi1>
    %18 = vector.broadcast %17 : vector<2x256xi1> to vector<2x256xi1>
    %19 = arith.xori %15, %18 : vector<2x256xi1>
    %20 = arith.andi %19, %13 : vector<2x256xi1>
    %21 = vector.broadcast %9 : i32 to vector<2x256xi32>
    %22 = arith.addi %11, %21 : vector<2x256xi32>
    %23 = arith.select %20, %22, %11 : vector<2x256xi1>, vector<2x256xi32>
    %c1_i32_9 = arith.constant 1 : i32
    %24 = vector.broadcast %c1_i32_9 : i32 to vector<2x256xi32>
    %25 = arith.cmpi eq, %23, %24 : vector<2x256xi32>
    %26 = arith.select %25, %3, %6 : vector<2x256xi1>, vector<2x256xf32>
    %27 = arith.select %25, %5, %4 : vector<2x256xi1>, vector<2x256xf32>
    %28 = math.atan2 %26, %27 : vector<2x256xf32>
    %c255_i32_10 = arith.constant 255 : i32
    %29 = tpu.dynamic_rotate %28 by %c255_i32_10 dim 1 : vector<2x256xf32>, i32 -> vector<2x256xf32>
    %30 = arith.subf %28, %29 : vector<2x256xf32>
    %31 = math.absf %30 : vector<2x256xf32>
    %cst = arith.constant 3.14159274 : f32
    %32 = vector.broadcast %cst : f32 to vector<2x256xf32>
    %33 = arith.cmpf ogt, %31, %32 : vector<2x256xf32>
    %cst_11 = arith.constant 6.28318548 : f32
    %34 = vector.broadcast %cst_11 : f32 to vector<2x256xf32>
    %35 = arith.subf %34, %31 : vector<2x256xf32>
    %36 = arith.select %33, %35, %31 : vector<2x256xi1>, vector<2x256xf32>
    %cst_12 = arith.constant 0.000000e+00 : f32
    %37 = vector.broadcast %cst_12 : f32 to vector<2x256xf32>
    %38 = arith.select %25, %37, %36 : vector<2x256xi1>, vector<2x256xf32>
    %c0_13 = arith.constant 0 : index
    %c0_14 = arith.constant 0 : index
    %39 = vector.load %arg4[%c0_13, %c0_14] : memref<8x128xf32, #tpu.memory_space<vmem>>, vector<8x128xf32>
    %40 = vector.shape_cast %38 : vector<2x256xf32> to vector<1x2x256xf32>
    %cst_15 = arith.constant dense<0.000000e+00> : vector<1xf32>
    %41 = vector.multi_reduction <add>, %40, %cst_15 [1, 2] : vector<1x2x256xf32> to vector<1xf32>
    %42 = vector.shape_cast %41 : vector<1xf32> to vector<1x1x1xf32>
    %43 = vector.extract %42[0, 0, 0] : f32 from vector<1x1x1xf32>
    %44 = tpu.iota {dimensions = array<i32: 0>} : vector<8x128xi32>
    %45 = tpu.iota {dimensions = array<i32: 1>} : vector<8x128xi32>
    %c0_i32_16 = arith.constant 0 : i32
    %46 = vector.broadcast %c0_i32_16 : i32 to vector<8x128xi32>
    %47 = arith.cmpi eq, %44, %46 : vector<8x128xi32>
    %c0_i32_17 = arith.constant 0 : i32
    %48 = vector.broadcast %c0_i32_17 : i32 to vector<8x128xi32>
    %49 = arith.cmpi eq, %45, %48 : vector<8x128xi32>
    %50 = arith.andi %47, %49 : vector<8x128xi1>
    %cst_18 = arith.constant 0.000000e+00 : f32
    %51 = vector.broadcast %43 : f32 to vector<8x128xf32>
    %52 = vector.broadcast %cst_18 : f32 to vector<8x128xf32>
    %53 = arith.select %50, %51, %52 : vector<8x128xi1>, vector<8x128xf32>
    %54 = arith.addf %39, %53 : vector<8x128xf32>
    %c0_19 = arith.constant 0 : index
    %c0_20 = arith.constant 0 : index
    %55 = vector.load %arg4[%c0_19, %c0_20] : memref<8x128xf32, #tpu.memory_space<vmem>>, vector<8x128xf32>
    tpu.vector_store %arg4[%c0_19, %c0_20], %54 {strides = array<i32>} : memref<8x128xf32, #tpu.memory_space<vmem>>, vector<8x128xf32>,
    %c0_i32_21 = arith.constant 0 : i32
    %56 = arith.cmpi eq, %arg1, %c0_i32_21 : i32
    %57 = arith.extui %56 : i1 to i32
    %c0_i32_22 = arith.constant 0 : i32
    %58 = arith.cmpi ne, %57, %c0_i32_22 : i32
    scf.if %58 {
      %c14_i32 = arith.constant 14 : i32
      %59 = vector.broadcast %c14_i32 : i32 to vector<2x256xi32>
      %60 = arith.cmpi eq, %7, %59 : vector<2x256xi32>
      %cst_23 = arith.constant 0.000000e+00 : f32
      %61 = vector.broadcast %cst_23 : f32 to vector<2x256xf32>
      %62 = arith.select %60, %38, %61 : vector<2x256xi1>, vector<2x256xf32>
      %c0_24 = arith.constant 0 : index
      %c0_25 = arith.constant 0 : index
      %63 = vector.load %arg5[%c0_24, %c0_25] : memref<8x128xf32, #tpu.memory_space<vmem>>, vector<8x128xf32>
      %64 = vector.shape_cast %62 : vector<2x256xf32> to vector<1x2x256xf32>
      %cst_26 = arith.constant dense<0.000000e+00> : vector<1xf32>
      %65 = vector.multi_reduction <add>, %64, %cst_26 [1, 2] : vector<1x2x256xf32> to vector<1xf32>
      %66 = vector.shape_cast %65 : vector<1xf32> to vector<1x1x1xf32>
      %67 = vector.extract %66[0, 0, 0] : f32 from vector<1x1x1xf32>
      %68 = tpu.iota {dimensions = array<i32: 0>} : vector<8x128xi32>
      %69 = tpu.iota {dimensions = array<i32: 1>} : vector<8x128xi32>
      %c0_i32_27 = arith.constant 0 : i32
      %70 = vector.broadcast %c0_i32_27 : i32 to vector<8x128xi32>
      %71 = arith.cmpi eq, %68, %70 : vector<8x128xi32>
      %c0_i32_28 = arith.constant 0 : i32
      %72 = vector.broadcast %c0_i32_28 : i32 to vector<8x128xi32>
      %73 = arith.cmpi eq, %69, %72 : vector<8x128xi32>
      %74 = arith.andi %71, %73 : vector<8x128xi1>
      %cst_29 = arith.constant 0.000000e+00 : f32
      %75 = vector.broadcast %67 : f32 to vector<8x128xf32>
      %76 = vector.broadcast %cst_29 : f32 to vector<8x128xf32>
      %77 = arith.select %74, %75, %76 : vector<8x128xi1>, vector<8x128xf32>
      %78 = arith.addf %63, %77 : vector<8x128xf32>
      %c0_30 = arith.constant 0 : index
      %c0_31 = arith.constant 0 : index
      %79 = vector.load %arg5[%c0_30, %c0_31] : memref<8x128xf32, #tpu.memory_space<vmem>>, vector<8x128xf32>
      tpu.vector_store %arg5[%c0_30, %c0_31], %78 {strides = array<i32>} : memref<8x128xf32, #tpu.memory_space<vmem>>, vector<8x128xf32>,
    } else {
    }
    return
  }
  func.func @transform_0(%arg0: i32, %arg1: i32) -> (i32, i32) {
    %c0_i32 = arith.constant 0 : i32
    return %arg0, %arg1 : i32, i32
  }
  func.func @transform_1(%arg0: i32, %arg1: i32) -> (i32, i32) {
    %c0_i32 = arith.constant 0 : i32
    return %arg0, %arg1 : i32, i32
  }
  func.func @transform_2(%arg0: i32, %arg1: i32) -> (i32, i32) {
    %c0_i32 = arith.constant 0 : i32
    %c0_i32_0 = arith.constant 0 : i32
    return %arg0, %c0_i32 : i32, i32
  }
  func.func @transform_3(%arg0: i32, %arg1: i32) -> (i32, i32) {
    %c0_i32 = arith.constant 0 : i32
    %c0_i32_0 = arith.constant 0 : i32
    return %arg0, %c0_i32 : i32, i32
  }
}

</mosaic_0001>

<llo_original>
// kernel: directional_gps_loss.1
$region0: #{directional_gps_loss.1}
  #allocation0 [shape = 'u32[]', space=smem, size = 0x4, offset = 0x4, fixed_abs, tag = 'smem constant byte address 0x4 - core index']
  #allocation1 [shape = 'u32[144,128]{1,0:T(1,128)}', space=vmem, size = 0x12000, scoped, tag = 'internal scratch']
  %s0 = inlined_call_operand.hbm [shape: f32[2,256], index: 0, kind: input, shape index: {}]
  %s1 = inlined_call_operand.hbm [shape: f32[2,256], index: 1, kind: input, shape index: {}]
  %s2 = inlined_call_operand.hbm [shape: f32[8,128], index: 2, kind: output, shape index: {0}]
  %s3 = inlined_call_operand.hbm [shape: f32[8,128], index: 3, kind: output, shape index: {1}]
  %4 = xla_tuple %s2, %s3
  %s5 = sld [smem:[#allocation0]]
  $region42: #{directional_gps_loss.1} parent=0
    _
  %s7 = ssub.s32 1, %s5
  %s8 = scalar_select 0, %s7, %s5
  $region1: #{directional_gps_loss.1} parent=0
    #allocation2 [shape = 'u8[2048]{0}', space=vmem, size = 0x800, scoped, tag = 'input window, operand 0, single buffered']
    #allocation3 [shape = 's32[1]{0}', space=sflag, size = 0x4, scoped, tag = 'scoped memory for directional_gps_loss.1']
    #allocation4 [shape = 's32[1]{0}', space=sflag, size = 0x4, scoped, tag = 'scoped memory for directional_gps_loss.1']
    #allocation5 [shape = 'u8[2048]{0}', space=vmem, size = 0x800, scoped, tag = 'input window, operand 1, single buffered']
    #allocation6 [shape = 's32[1]{0}', space=sflag, size = 0x4, scoped, tag = 'scoped memory for directional_gps_loss.1']
    #allocation7 [shape = 'u8[4096]{0}', space=vmem, size = 0x1000, scoped, tag = 'output window, operand 0, single buffered']
    #allocation8 [shape = 'u8[4096]{0}', space=vmem, size = 0x1000, scoped, tag = 'output window, operand 1, single buffered']
    #allocation9 [shape = 's32[1]{0}', space=sflag, size = 0x4, scoped, tag = 'scoped memory for directional_gps_loss.1']
    %9 = vsyncpa [#allocation3], 0
    %10 = vsyncpa [#allocation6], 0
    %11 = vsyncpa [#allocation4], 0
    %12 = vsyncpa [#allocation9], 0
    // Predicated region
    $region2: #{directional_gps_loss.1} parent=1 // pred_check
      _
    $region3: #{directional_gps_loss.1} parent=1 // pred_check_branch
      %14 = sbr.rel (0) target = $region5
    $region4: #{directional_gps_loss.1} parent=1 // pred_region
      %s16 = ssub.s32 64, 64
      %17 = vsyncadd [#allocation3], %s16
      %s19 = sshll.u32 [#allocation2], 4
      %s20 = int_to_ptr.vmem [resolvable:$true] %s19
      %22 = dma.hbm_to_vmem [thread:$0]  %s0, 64, %s20, [#allocation3]
    $region5: #{directional_gps_loss.1} parent=1 // pred_fallthru
      _
    // Predicated region
    $region6: #{directional_gps_loss.1} parent=1 // pred_check
      _
    $region7: #{directional_gps_loss.1} parent=1 // pred_check_branch
      %24 = sbr.rel (0) target = $region9
    $region8: #{directional_gps_loss.1} parent=1 // pred_region
      %s26 = ssub.s32 64, 64
      %27 = vsyncadd [#allocation6], %s26
      %s29 = sshll.u32 [#allocation5], 4
      %s30 = int_to_ptr.vmem [resolvable:$true] %s29
      %32 = dma.hbm_to_vmem [thread:$0]  %s1, 64, %s30, [#allocation6]
    $region9: #{directional_gps_loss.1} parent=1 // pred_fallthru
      _
    // Predicated region
    $region10: #{directional_gps_loss.1} parent=1 // pred_check
      _
    $region11: #{directional_gps_loss.1} parent=1 // pred_check_branch
      %34 = sbr.rel (0) target = $region13
    $region12: #{directional_gps_loss.1} parent=1 // pred_region
      %35 = dma.done [#allocation3], 64
    $region13: #{directional_gps_loss.1} parent=1 // pred_fallthru
      _
    // Predicated region
    $region14: #{directional_gps_loss.1} parent=1 // pred_check
      _
    $region15: #{directional_gps_loss.1} parent=1 // pred_check_branch
      %37 = sbr.rel (0) target = $region17
    $region16: #{directional_gps_loss.1} parent=1 // pred_region
      %38 = dma.done [#allocation6], 64
    $region17: #{directional_gps_loss.1} parent=1 // pred_fallthru
      _
    %p39 = scmp.eq.s32.totalorder 0, 0
    // Predicated region
    $region18: #{directional_gps_loss.1} parent=1 // pred_check
      %p40 = pneg %p39
    $region19: #{directional_gps_loss.1} parent=1 // pred_check_branch
      %42 = sbr.rel (%p40) target = $region21
    $region20: #{directional_gps_loss.1} parent=1 // pred_region
      %43 = vst [vmem:[#allocation7] sm:$0xff] 0.0
      %44 = vst [vmem:[#allocation8] sm:$0xff] 0.0
    $region21: #{directional_gps_loss.1} parent=1 // pred_fallthru
      _
    %v45 = vld [vmem:[#allocation2] sm:$0xf]
    %v46 = vld [vmem:[#allocation5] sm:$0xf]
    %v49 = vunpack.c.l.s4 1983009808
    %v50 = vunpack.c.0.s8 %v49
    %v51 = vlaneseq
    %v52 = vshrl.u32 %v51, 7
    %v53 = vsub.s32 %v50, %v52
    %v54 = vrot.slane %v45, %v53
    %v55 = vcombine.high %v54, %v54
    %58 = vrot.lane.b32.xlu0 %v54, 1
    %v59 = vpop.permute.xlu0 %58
    %60 = vrot.lane.b32.xlu0 %v55, 1
    %v61 = vpop.permute.xlu0 %60
    %v62 = vlaneseq
    %v63 = vand.u32 %v62, 127
    %vm64 = vcmp.lt.s32.totalorder %v63, 1
    %v65 = vsel %vm64, %v59, %v61
    %v66 = vsel %vm64, %v61, %v59
    %v69 = vunpack.c.l.s4 1983009808
    %v70 = vunpack.c.0.s8 %v69
    %v71 = vlaneseq
    %v72 = vshrl.u32 %v71, 7
    %v73 = vsub.s32 %v70, %v72
    %v74 = vrot.slane %v46, %v73
    %v75 = vcombine.high %v74, %v74
    %78 = vrot.lane.b32.xlu0 %v74, 127
    %v79 = vpop.permute.xlu0 %78
    %80 = vrot.lane.b32.xlu0 %v75, 127
    %v81 = vpop.permute.xlu0 %80
    %vm82 = vcmp.lt.s32.totalorder %v63, 127
    %v83 = vsel %vm82, %v79, %v81
    %v84 = vsel %vm82, %v81, %v79
    %v85 = vadd.s32 %v63, 128
    %vm86 = vcmp.lt.s32.totalorder %v63, 0
    %v87 = vsub.s32 0, %v63
    %v88 = vsel %vm86, %v87, %v63
    %v89 = vshrl.u32 %v88, 1
    %v90 = vand.u32 %v88, 1
    %v91 = vsub.s32 0, %v90
    %v92 = vsel %vm86, %v91, %v90
    %vm93 = vcmp.lt.s32.totalorder %v85, 0
    %v94 = vsub.s32 0, %v85
    %v95 = vsel %vm93, %v94, %v85
    %v96 = vshrl.u32 %v95, 1
    %v97 = vand.u32 %v95, 1
    %v98 = vsub.s32 0, %v97
    %v99 = vsel %vm93, %v98, %v97
    %vm100 = vcmp.ne.s32.totalorder %v92, 0
    %vm101 = vcmp.ne.s32.totalorder %v99, 0
    %vm102 = vcmp.lt.s32.totalorder %v92, 0
    %vm103 = vcmp.lt.s32.totalorder %v99, 0
    %vm104 = vmand %vm102, %vm100
    %vm105 = vmand %vm103, %vm101
    %v106 = vadd.s32 %v92, 2
    %v107 = vadd.s32 %v99, 2
    %v108 = vsel %vm104, %v106, %v92
    %v109 = vsel %vm105, %v107, %v99
    %vm110 = vcmp.eq.s32.totalorder %v108, 1
    %vm111 = vcmp.eq.s32.totalorder %v109, 1
    %v112 = vsel %vm110, %v54, %v83
    %v113 = vsel %vm111, %v55, %v84
    %v114 = vsel %vm110, %v66, %v74
    %v115 = vsel %vm111, %v65, %v75
    %v116 = vand.u32 2147483647, %v114
    %v117 = vand.u32 2147483647, %v112
    %v118 = vmin.f32 %v116, %v117
    %v119 = vmax.f32 %v116, %v117
    %v120 = vrcp.pop %v119
    %v121 = vmul.f32 %v118, %v120
    %v122 = vmul.f32 %v121, %v121
    %v123 = vmul.f32 0.002785687, %v122
    %v124 = vadd.f32 %v123, -0.015866
    %v125 = vmul.f32 %v124, %v122
    %v126 = vadd.f32 %v125, 0.04247222
    %v127 = vmul.f32 %v126, %v122
    %v128 = vadd.f32 %v127, -0.074975304
    %v129 = vmul.f32 %v128, %v122
    %v130 = vadd.f32 %v129, 0.1064488
    %v131 = vmul.f32 %v130, %v122
    %v132 = vadd.f32 %v131, -0.14207031
    %v133 = vmul.f32 %v132, %v122
    %v134 = vadd.f32 %v133, 0.19993454
    %v135 = vmul.f32 %v134, %v122
    %v136 = vadd.f32 %v135, -0.33333147
    %v137 = vmul.f32 %v136, %v122
    %v138 = vmul.f32 %v137, %v121
    %v139 = vadd.f32 %v138, %v121
    %vm140 = vcmp.gt.f32.partialorder %v117, %v116
    %v141 = vsub.f32 1.5707964, %v139
    %v142 = vsel %vm140, %v141, %v139
    %vm143 = vcmp.lt.f32.partialorder %v114, 0.0
    %v144 = vsub.f32 3.1415927, %v142
    %v145 = vsel %vm143, %v144, %v142
    %vm146 = vcmp.lt.s32.totalorder %v114, 0
    %v147 = vsel %vm146, 3.1415927, 0.0
    %vm148 = vcmp.eq.f32.partialorder %v112, 0.0
    %v149 = vsel %vm148, %v147, %v145
    %vm150 = vcmp.ne.f32.partialorder %v114, %v114
    %vm151 = vcmp.ne.f32.partialorder %v112, %v112
    %vm152 = vmor %vm150, %vm151
    %v153 = vsel %vm152, nan, %v149
    %vm154 = vcmp.lt.f32.partialorder %v114, 0.0
    %v155 = vsel %vm154, 2.3561945, 0.7853982
    %vm156 = vcmp.eq.s32.totalorder %v116, inf
    %vm157 = vcmp.eq.s32.totalorder %v117, inf
    %vm158 = vmand %vm156, %vm157
    %v159 = vsel %vm158, %v155, %v153
    %v160 = vand.u32 2147483647, %v159
    %v161 = vand.u32 %v112, 2147483648
    %v162 = vor.u32 %v160, %v161
    %v163 = vand.u32 2147483647, %v115
    %v164 = vand.u32 2147483647, %v113
    %v165 = vmin.f32 %v163, %v164
    %v166 = vmax.f32 %v163, %v164
    %v167 = vrcp.pop %v166
    %v168 = vmul.f32 %v165, %v167
    %v169 = vmul.f32 %v168, %v168
    %v170 = vmul.f32 0.002785687, %v169
    %v171 = vadd.f32 %v170, -0.015866
    %v172 = vmul.f32 %v171, %v169
    %v173 = vadd.f32 %v172, 0.04247222
    %v174 = vmul.f32 %v173, %v169
    %v175 = vadd.f32 %v174, -0.074975304
    %v176 = vmul.f32 %v175, %v169
    %v177 = vadd.f32 %v176, 0.1064488
    %v178 = vmul.f32 %v177, %v169
    %v179 = vadd.f32 %v178, -0.14207031
    %v180 = vmul.f32 %v179, %v169
    %v181 = vadd.f32 %v180, 0.19993454
    %v182 = vmul.f32 %v181, %v169
    %v183 = vadd.f32 %v182, -0.33333147
    %v184 = vmul.f32 %v183, %v169
    %v185 = vmul.f32 %v184, %v168
    %v186 = vadd.f32 %v185, %v168
    %vm187 = vcmp.gt.f32.partialorder %v164, %v163
    %v188 = vsub.f32 1.5707964, %v186
    %v189 = vsel %vm187, %v188, %v186
    %vm190 = vcmp.lt.f32.partialorder %v115, 0.0
    %v191 = vsub.f32 3.1415927, %v189
    %v192 = vsel %vm190, %v191, %v189
    %vm193 = vcmp.lt.s32.totalorder %v115, 0
    %v194 = vsel %vm193, 3.1415927, 0.0
    %vm195 = vcmp.eq.f32.partialorder %v113, 0.0
    %v196 = vsel %vm195, %v194, %v192
    %vm197 = vcmp.ne.f32.partialorder %v115, %v115
    %vm198 = vcmp.ne.f32.partialorder %v113, %v113
    %vm199 = vmor %vm197, %vm198
    %v200 = vsel %vm199, nan, %v196
    %vm201 = vcmp.lt.f32.partialorder %v115, 0.0
    %v202 = vsel %vm201, 2.3561945, 0.7853982
    %vm203 = vcmp.eq.s32.totalorder %v163, inf
    %vm204 = vcmp.eq.s32.totalorder %v164, inf
    %vm205 = vmand %vm203, %vm204
    %v206 = vsel %vm205, %v202, %v200
    %v207 = vand.u32 2147483647, %v206
    %v208 = vand.u32 %v113, 2147483648
    %v209 = vor.u32 %v207, %v208
    %210 = vrot.lane.b32.xlu0 %v162, 127
    %v211 = vpop.permute.xlu0 %210
    %212 = vrot.lane.b32.xlu0 %v209, 127
    %v213 = vpop.permute.xlu0 %212
    %v214 = vsel %vm82, %v211, %v213
    %v215 = vsel %vm82, %v213, %v211
    %v216 = vsub.f32 %v162, %v214
    %v217 = vsub.f32 %v209, %v215
    %v218 = vand.u32 2147483647, %v216
    %v219 = vand.u32 2147483647, %v217
    %vm220 = vcmp.gt.f32.partialorder %v218, 3.1415927
    %vm221 = vcmp.gt.f32.partialorder %v219, 3.1415927
    %v222 = vsub.f32 6.2831855, %v218
    %v223 = vsub.f32 6.2831855, %v219
    %v224 = vsel %vm220, %v222, %v218
    %v225 = vsel %vm221, %v223, %v219
    %v226 = vsel %vm110, 0.0, %v224
    %v227 = vsel %vm111, 0.0, %v225
    %v228 = vld [vmem:[#allocation7] sm:$0xff]
    %vm229 = vcmask 1041408
    %v230 = vsel %vm229, %v226, 0.0
    %v231 = vsel %vm229, %v227, 0.0
    %v232 = vadd.f32 %v230, %v231
    %233 = vadd.xlane.f32.xlu0 %v232
    %v234 = vpop.xlane.xlu0 %233
    %v235 = vrot.slane %v234, 4
    %v236 = vadd.f32 %v234, %v235
    %v237 = vrot.slane %v236, 2
    %v238 = vadd.f32 %v236, %v237
    %v239 = vrot.slane %v238, 1
    %v240 = vadd.f32 %v238, %v239
    %s241 = vtos %v240
    %v242 = vlaneseq
    %v243 = vshrl.u32 %v242, 7
    %vm244 = vcmp.eq.s32.totalorder %v243, 0
    %vm245 = vcmp.eq.s32.totalorder %v63, 0
    %vm246 = vmand %vm244, %vm245
    %v247 = vstv %s241
    %v248 = vsel %vm246, %v247, 0.0
    %v249 = vadd.f32 %v228, %v248
    %250 = vst [vmem:[#allocation7] sm:$0xff] %v249
    // Predicated region
    $region22: #{directional_gps_loss.1} parent=1 // pred_check
      %p251 = pneg %p39
    $region23: #{directional_gps_loss.1} parent=1 // pred_check_branch
      %253 = sbr.rel (%p251) target = $region25
    $region24: #{directional_gps_loss.1} parent=1 // pred_region
      %vm254 = vcmp.eq.s32.totalorder %v63, 14
      %vm255 = vcmp.eq.s32.totalorder %v85, 14
      %v256 = vsel %vm254, %v226, 0.0
      %v257 = vsel %vm255, %v227, 0.0
      %v258 = vld [vmem:[#allocation8] sm:$0xff]
      %v259 = vsel %vm229, %v256, 0.0
      %v260 = vsel %vm229, %v257, 0.0
      %v261 = vadd.f32 %v259, %v260
      %262 = vadd.xlane.f32.xlu0 %v261
      %v263 = vpop.xlane.xlu0 %262
      %v264 = vrot.slane %v263, 4
      %v265 = vadd.f32 %v263, %v264
      %v266 = vrot.slane %v265, 2
      %v267 = vadd.f32 %v265, %v266
      %v268 = vrot.slane %v267, 1
      %v269 = vadd.f32 %v267, %v268
      %s270 = vtos %v269
      %v271 = vstv %s270
      %v272 = vsel %vm246, %v271, 0.0
      %v273 = vadd.f32 %v258, %v272
      %274 = vst [vmem:[#allocation8] sm:$0xff] %v273
    $region25: #{directional_gps_loss.1} parent=1 // pred_fallthru
      _
    // Predicated region
    $region26: #{directional_gps_loss.1} parent=1 // pred_check
      _
    $region27: #{directional_gps_loss.1} parent=1 // pred_check_branch
      %276 = sbr.rel (0) target = $region29
    $region28: #{directional_gps_loss.1} parent=1 // pred_region
      %s278 = ssub.s32 128, 128
      %279 = vsyncadd [#allocation4], %s278
      %s281 = sshll.u32 [#allocation7], 4
      %s282 = int_to_ptr.vmem [resolvable:$true] %s281
      %284 = dma.vmem_to_hbm [thread:$0]  %s282, 128, %s2, [#allocation4]
    $region29: #{directional_gps_loss.1} parent=1 // pred_fallthru
      _
    // Predicated region
    $region30: #{directional_gps_loss.1} parent=1 // pred_check
      _
    $region31: #{directional_gps_loss.1} parent=1 // pred_check_branch
      %286 = sbr.rel (0) target = $region33
    $region32: #{directional_gps_loss.1} parent=1 // pred_region
      %s288 = ssub.s32 128, 128
      %289 = vsyncadd [#allocation9], %s288
      %s291 = sshll.u32 [#allocation8], 4
      %s292 = int_to_ptr.vmem [resolvable:$true] %s291
      %294 = dma.vmem_to_hbm [thread:$0]  %s292, 128, %s3, [#allocation9]
    $region33: #{directional_gps_loss.1} parent=1 // pred_fallthru
      _
    // Predicated region
    $region34: #{directional_gps_loss.1} parent=1 // pred_check
      _
    $region35: #{directional_gps_loss.1} parent=1 // pred_check_branch
      %296 = sbr.rel (0) target = $region37
    $region36: #{directional_gps_loss.1} parent=1 // pred_region
      %297 = dma.done [#allocation4], 128
    $region37: #{directional_gps_loss.1} parent=1 // pred_fallthru
      _
    // Predicated region
    $region38: #{directional_gps_loss.1} parent=1 // pred_check
      _
    $region39: #{directional_gps_loss.1} parent=1 // pred_check_branch
      %299 = sbr.rel (0) target = $region41
    $region40: #{directional_gps_loss.1} parent=1 // pred_region
      %300 = dma.done [#allocation9], 128
    $region41: #{directional_gps_loss.1} parent=1 // pred_fallthru
      _
    %301 = vsyncpa [#allocation3], 1
    %302 = vsyncpa [#allocation6], 1
    %303 = vsyncpa [#allocation4], 1
    %304 = vsyncpa [#allocation9], 1

</llo_original>
